<compile_context>
chip_gen: v6e
topology: v6e:2x2x1
jax: 0.10.0
libtpu: 0.0.40
codegen_flags: <defaults>
</compile_context>

<pallas_src>
import functools
import math

import jax
import jax.numpy as jnp
from jax.experimental import pallas as pl
from jax.experimental.pallas import tpu as pltpu


_LANE = 128
_SUBLANE_BF16 = 16          # bf16 packs 16 sublanes per vreg
_MAX_BATCH_TILE = 8192      # double-buffered x+out tiles stay well under v7x VMEM at this cap


def _round_up(v: int, m: int) -> int:
    return ((v + m - 1) // m) * m


def _td3_policy_kernel(x_ref, w_ref, b_ref, out_ref, *, num_layers: int, action_bound: float):
    """x_ref: (TB, P) bf16 batch tile
    w_ref:  (L, P, P) bf16  packed, zero-padded weights (VMEM-resident across tiles)
    b_ref:  (L, P)    f32   packed, zero-padded biases
    out_ref:(TB, P)   f32   lane-dense output tile
    """
    h = x_ref[...]                                       # bf16 activations feed the MXU
    for i in range(num_layers):                          # static unroll over layers
        acc = jnp.dot(h, w_ref[i], preferred_element_type=jnp.float32)   # MXU, f32 accum
        a = jnp.tanh(acc + b_ref[i:i + 1, :])            # f32 bias add + EUP tanh (v5e-safe)
        if i + 1 < num_layers:
            h = a.astype(jnp.bfloat16)                   # back to bf16 for the next dot
        else:
            out_ref[...] = (a * jnp.float32(action_bound)).astype(out_ref.dtype)


def pack_td3_policy_params(params):
    """One-time packing: pad every layer to (P, P) with P = max lane-rounded dim, cast
    weights to bf16, stack into a single (L, P, P) array; biases into (L, P) f32.
    Call once and reuse the returned device arrays across forward calls."""
    dims = [params[0][0].shape[0]] + [w.shape[1] for (w, _) in params]
    p_max = max(_round_up(d, _LANE) for d in dims)
    num_layers = len(params)

    w_pack = jnp.zeros((num_layers, p_max, p_max), jnp.bfloat16)
    b_pack = jnp.zeros((num_layers, p_max), jnp.float32)
    for i, (w, b) in enumerate(params):
        w_pack = w_pack.at[i, : w.shape[0], : w.shape[1]].set(w.astype(jnp.bfloat16))
        b_pack = b_pack.at[i, : b.shape[-1]].set(b.reshape(-1).astype(jnp.float32))
    return jax.device_put(w_pack), jax.device_put(b_pack)


@functools.partial(jax.jit, static_argnames=("action_dim", "action_bound", "batch_tile"))
def td3_policy_forward(x, w_pack, b_pack, *, action_dim: int,
                       action_bound: float = 1.0, batch_tile: int = 1024):
    """x: (batch, state_dim) f32.  w_pack/b_pack: from pack_td3_policy_params.
    Returns (batch, action_dim) f32."""
    batch, state_dim = x.shape
    num_layers, p_max, _ = w_pack.shape

    # Batch tile: multiple of 16 (bf16 sublane packing / (8,128) rule), capped for VMEM.
    tb = min(int(batch_tile), _MAX_BATCH_TILE, _round_up(batch, _SUBLANE_BF16))
    tb = _round_up(tb, _SUBLANE_BF16)
    padded_batch = _round_up(batch, tb)

    # x pad + bf16 cast fuses under jit (no eager dispatch).
    xp = jnp.pad(x.astype(jnp.bfloat16),
                 ((0, padded_batch - batch), (0, p_max - state_dim)))

    kernel = functools.partial(
        _td3_policy_kernel, num_layers=num_layers, action_bound=float(action_bound)
    )

    # Explicit VMEM budget: double-buffered x (bf16) + out (f32) tiles plus the resident
    # weight/bias packs, with 2x headroom; capped at 32 MiB (safe on v5e/v6e/v7x).
    vmem_bytes = (2 * tb * p_max * (2 + 4)
                  + 2 * num_layers * p_max * (p_max * 2 + 4))
    vmem_limit = int(min(max(2 * vmem_bytes, 8 << 20), 32 << 20))

    out_padded = pl.pallas_call(
        kernel,
        out_shape=jax.ShapeDtypeStruct((padded_batch, p_max), jnp.float32),
        grid_spec=pl.GridSpec(
            grid=(padded_batch // tb,),
            in_specs=[
                pl.BlockSpec((tb, p_max), lambda i: (i, 0)),                    # x: batch-tiled
                pl.BlockSpec((num_layers, p_max, p_max), lambda i: (0, 0, 0)),  # weights: resident
                pl.BlockSpec((num_layers, p_max), lambda i: (0, 0)),            # biases: resident
            ],
            out_specs=pl.BlockSpec((tb, p_max), lambda i: (i, 0)),
        ),
        compiler_params=pltpu.CompilerParams(
            dimension_semantics=("parallel",),   # independent batch tiles -> 2 TCs on v7x
            vmem_limit_bytes=vmem_limit,
        ),
    )(xp, w_pack, b_pack)

    return out_padded[:batch, :action_dim]


def init_td3_policy_params(key, state_dim, hidden_layers_dim, action_dim):
    """Deterministic init mimicking torch.nn.Linear default:
    U(-1/sqrt(fan_in), 1/sqrt(fan_in)) for both W and b.  W stored (in, out)."""
    dims = [state_dim] + list(hidden_layers_dim) + [action_dim]
    params = []
    for i in range(len(dims) - 1):
        fan_in, fan_out = dims[i], dims[i + 1]
        bound = 1.0 / math.sqrt(fan_in)
        key, kw, kb = jax.random.split(key, 3)
        w = jax.random.uniform(kw, (fan_in, fan_out), jnp.float32, minval=-bound, maxval=bound)
        b = jax.random.uniform(kb, (1, fan_out), jnp.float32, minval=-bound, maxval=bound)
        params.append((w, b))
    return params


def _reference_forward_bf16(x, params, action_bound):
    """Reference emulating the kernel's numerics: bf16 dot operands, f32 accumulate,
    f32 bias/tanh/scale."""
    h = x.astype(jnp.bfloat16)
    for (w, b) in params[:-1]:
        acc = jnp.dot(h, w.astype(jnp.bfloat16), preferred_element_type=jnp.float32)
        h = jnp.tanh(acc + b.astype(jnp.float32)).astype(jnp.bfloat16)
    wo, bo = params[-1]
    acc = jnp.dot(h, wo.astype(jnp.bfloat16), preferred_element_type=jnp.float32)
    return jnp.tanh(acc + bo.astype(jnp.float32)) * action_bound


def _reference_forward_f32(x, params, action_bound):
    """Pure-f32 reference matching the original PyTorch module's numerics."""
    h = x
    for (w, b) in params[:-1]:
        h = jnp.tanh(jnp.dot(h, w) + b)
    wo, bo = params[-1]
    return jnp.tanh(jnp.dot(h, wo) + bo) * action_bound


if __name__ == "__main__":
    # Small shapes consistent with the module's forward.
    state_dim = 16
    hidden_layers_dim = [32, 32]
    action_dim = 8
    action_bound = 2.0

    key = jax.random.PRNGKey(0)
    key, kx1, kx2 = jax.random.split(key, 3)
    params = init_td3_policy_params(key, state_dim, hidden_layers_dim, action_dim)

    # One-time packing (device-resident, reused across every forward call).
    w_pack, b_pack = pack_td3_policy_params(params)

    # Case 1: tiny batch (single tile, grid=1).
    x1 = jax.random.normal(kx1, (2, state_dim), jnp.float32)
    out1 = jax.block_until_ready(
        td3_policy_forward(x1, w_pack, b_pack, action_dim=action_dim, action_bound=action_bound)
    )
    assert out1.shape == (2, action_dim)
    assert jnp.allclose(out1, _reference_forward_bf16(x1, params, action_bound),
                        atol=1e-4, rtol=1e-4), "mismatch vs bf16-emulating reference (batch=2)"
    assert jnp.allclose(out1, _reference_forward_f32(x1, params, action_bound),
                        atol=3e-2, rtol=3e-2), "excess drift vs f32 reference (batch=2)"

    # Case 2: exercises multi-step batch grid + batch padding (grid=3 tiles of 16,
    # parallel axis -> both v7x TensorCores get work).
    x2 = jax.random.normal(kx2, (40, state_dim), jnp.float32)
    out2 = jax.block_until_ready(
        td3_policy_forward(x2, w_pack, b_pack, action_dim=action_dim,
                           action_bound=action_bound, batch_tile=16)
    )
    assert out2.shape == (40, action_dim)
    assert jnp.allclose(out2, _reference_forward_bf16(x2, params, action_bound),
                        atol=1e-4, rtol=1e-4), "mismatch vs bf16-emulating reference (batch=40)"
    assert jnp.allclose(out2, _reference_forward_f32(x2, params, action_bound),
                        atol=3e-2, rtol=3e-2), "excess drift vs f32 reference (batch=40)"

    print("KERNEL_OK")
</pallas_src>

<mosaic_0001>
module attributes {stable_mosaic.version = 11 : i64} {
  func.func @_td3_policy_kernel(%arg0: i32, %arg1: memref<16x128xbf16, #tpu.memory_space<vmem>>, %arg2: memref<3x128x128xbf16, #tpu.memory_space<vmem>>, %arg3: memref<3x128xf32, #tpu.memory_space<vmem>>, %arg4: memref<16x128xf32, #tpu.memory_space<vmem>>) attributes {dimension_semantics = [#tpu.dimension_semantics<parallel>], iteration_bounds = array<i64: 1>, scalar_prefetch = 0 : i64, scratch_operands = 0 : i64, tpu.core_type = #tpu.core_type<tc>, window_params = [{transform_indices = @transform_0, window_bounds = array<i64: 16, 128>}, {pipeline_mode = #tpu.pipeline_mode<synchronous>, transform_indices = @transform_1, window_bounds = array<i64: 3, 128, 128>}, {pipeline_mode = #tpu.pipeline_mode<synchronous>, transform_indices = @transform_2, window_bounds = array<i64: 3, 128>}, {transform_indices = @transform_3, window_bounds = array<i64: 16, 128>}]} {
    %c0 = arith.constant 0 : index
    %c0_0 = arith.constant 0 : index
    %0 = vector.load %arg1[%c0, %c0_0] : memref<16x128xbf16, #tpu.memory_space<vmem>>, vector<16x128xbf16>
    %c0_1 = arith.constant 0 : index
    %c0_2 = arith.constant 0 : index
    %c0_3 = arith.constant 0 : index
    %1 = vector.load %arg2[%c0_1, %c0_2, %c0_3] : memref<3x128x128xbf16, #tpu.memory_space<vmem>>, vector<1x128x128xbf16>
    %2 = vector.shape_cast %1 : vector<1x128x128xbf16> to vector<128x128xbf16>
    %cst = arith.constant dense<0.000000e+00> : vector<16x128xf32>
    %3 = tpu.matmul %0, %2, %cst {dimension_numbers = #tpu.dot_dimension_numbers<[1], [0], [0], [1], [0, 0, 1, 1], [], []>} : vector<16x128xbf16>, vector<128x128xbf16>, vector<16x128xf32> -> vector<16x128xf32>
    %c0_4 = arith.constant 0 : index
    %c0_5 = arith.constant 0 : index
    %4 = vector.load %arg3[%c0_4, %c0_5] : memref<3x128xf32, #tpu.memory_space<vmem>>, vector<1x128xf32>
    %5 = vector.broadcast %4 : vector<1x128xf32> to vector<16x128xf32>
    %6 = arith.addf %3, %5 : vector<16x128xf32>
    %7 = math.tanh %6 : vector<16x128xf32>
    %8 = arith.truncf %7 : vector<16x128xf32> to vector<16x128xbf16>
    %c1 = arith.constant 1 : index
    %c0_6 = arith.constant 0 : index
    %c0_7 = arith.constant 0 : index
    %9 = vector.load %arg2[%c1, %c0_6, %c0_7] : memref<3x128x128xbf16, #tpu.memory_space<vmem>>, vector<1x128x128xbf16>
    %10 = vector.shape_cast %9 : vector<1x128x128xbf16> to vector<128x128xbf16>
    %cst_8 = arith.constant dense<0.000000e+00> : vector<16x128xf32>
    %11 = tpu.matmul %8, %10, %cst_8 {dimension_numbers = #tpu.dot_dimension_numbers<[1], [0], [0], [1], [0, 0, 1, 1], [], []>} : vector<16x128xbf16>, vector<128x128xbf16>, vector<16x128xf32> -> vector<16x128xf32>
    %c1_9 = arith.constant 1 : index
    %c0_10 = arith.constant 0 : index
    %12 = vector.load %arg3[%c1_9, %c0_10] : memref<3x128xf32, #tpu.memory_space<vmem>>, vector<1x128xf32>
    %13 = vector.broadcast %12 : vector<1x128xf32> to vector<16x128xf32>
    %14 = arith.addf %11, %13 : vector<16x128xf32>
    %15 = math.tanh %14 : vector<16x128xf32>
    %16 = arith.truncf %15 : vector<16x128xf32> to vector<16x128xbf16>
    %c2 = arith.constant 2 : index
    %c0_11 = arith.constant 0 : index
    %c0_12 = arith.constant 0 : index
    %17 = vector.load %arg2[%c2, %c0_11, %c0_12] : memref<3x128x128xbf16, #tpu.memory_space<vmem>>, vector<1x128x128xbf16>
    %18 = vector.shape_cast %17 : vector<1x128x128xbf16> to vector<128x128xbf16>
    %cst_13 = arith.constant dense<0.000000e+00> : vector<16x128xf32>
    %19 = tpu.matmul %16, %18, %cst_13 {dimension_numbers = #tpu.dot_dimension_numbers<[1], [0], [0], [1], [0, 0, 1, 1], [], []>} : vector<16x128xbf16>, vector<128x128xbf16>, vector<16x128xf32> -> vector<16x128xf32>
    %c2_14 = arith.constant 2 : index
    %c0_15 = arith.constant 0 : index
    %20 = vector.load %arg3[%c2_14, %c0_15] : memref<3x128xf32, #tpu.memory_space<vmem>>, vector<1x128xf32>
    %21 = vector.broadcast %20 : vector<1x128xf32> to vector<16x128xf32>
    %22 = arith.addf %19, %21 : vector<16x128xf32>
    %23 = math.tanh %22 : vector<16x128xf32>
    %cst_16 = arith.constant 2.000000e+00 : f32
    %24 = vector.broadcast %cst_16 : f32 to vector<16x128xf32>
    %25 = arith.mulf %23, %24 : vector<16x128xf32>
    %c0_17 = arith.constant 0 : index
    %c0_18 = arith.constant 0 : index
    %26 = vector.load %arg4[%c0_17, %c0_18] : memref<16x128xf32, #tpu.memory_space<vmem>>, vector<16x128xf32>
    tpu.vector_store %arg4[%c0_17, %c0_18], %25 {strides = array<i32>} : memref<16x128xf32, #tpu.memory_space<vmem>>, vector<16x128xf32>,
    return
  }
  func.func @transform_0(%arg0: i32) -> (i32, i32) {
    %c0_i32 = arith.constant 0 : i32
    %c0_i32_0 = arith.constant 0 : i32
    return %arg0, %c0_i32 : i32, i32
  }
  func.func @transform_1(%arg0: i32) -> (i32, i32, i32) {
    %c0_i32 = arith.constant 0 : i32
    %c0_i32_0 = arith.constant 0 : i32
    %c0_i32_1 = arith.constant 0 : i32
    %c0_i32_2 = arith.constant 0 : i32
    return %c0_i32, %c0_i32_0, %c0_i32_1 : i32, i32, i32
  }
  func.func @transform_2(%arg0: i32) -> (i32, i32) {
    %c0_i32 = arith.constant 0 : i32
    %c0_i32_0 = arith.constant 0 : i32
    %c0_i32_1 = arith.constant 0 : i32
    return %c0_i32, %c0_i32_0 : i32, i32
  }
  func.func @transform_3(%arg0: i32) -> (i32, i32) {
    %c0_i32 = arith.constant 0 : i32
    %c0_i32_0 = arith.constant 0 : i32
    return %arg0, %c0_i32 : i32, i32
  }
}

</mosaic_0001>

<llo_original>
// kernel: td3_policy_forward.1
$region0: #{td3_policy_forward.1}
  #allocation0 [shape = 'u32[]', space=smem, size = 0x4, offset = 0x4, fixed_abs, tag = 'smem constant byte address 0x4 - core index']
  #allocation1 [shape = 'u32[144,128]{1,0:T(1,128)}', space=vmem, size = 0x12000, scoped, tag = 'internal scratch']
  %s0 = inlined_call_operand.vmem [shape: bf16[16,128], index: 0, kind: input, shape index: {}]
  %s1 = inlined_call_operand.hbm [shape: bf16[3,128,128], index: 1, kind: input, shape index: {}]
  %s2 = inlined_call_operand.vmem [shape: f32[3,128], index: 2, kind: input, shape index: {}]
  %s3 = inlined_call_operand.vmem [shape: f32[16,128], index: 3, kind: output, shape index: {}]
  %s4 = sld [smem:[#allocation0]]
  $region26: #{td3_policy_forward.1} parent=0
    _
  %s6 = ssub.s32 1, %s4
  %s7 = scalar_select 0, %s6, %s4
  $region1: #{td3_policy_forward.1} parent=0
    #allocation2 [shape = 'u8[98304]{0}', space=vmem, size = 0x18000, scoped, tag = 'input window, operand 1, single buffered']
    #allocation3 [shape = 's32[1]{0}', space=sflag, size = 0x4, scoped, tag = 'scoped memory for td3_policy_forward.1']
    %8 = vsyncpa [#allocation3], 0
    // Predicated region
    $region2: #{td3_policy_forward.1} parent=1 // pred_check
      _
    $region3: #{td3_policy_forward.1} parent=1 // pred_check_branch
      %10 = sbr.rel (0) target = $region5
    $region4: #{td3_policy_forward.1} parent=1 // pred_region
      _
    $region5: #{td3_policy_forward.1} parent=1 // pred_fallthru
      _
    // Predicated region
    $region6: #{td3_policy_forward.1} parent=1 // pred_check
      _
    $region7: #{td3_policy_forward.1} parent=1 // pred_check_branch
      %12 = sbr.rel (0) target = $region9
    $region8: #{td3_policy_forward.1} parent=1 // pred_region
      %s14 = ssub.s32 3072, 3072
      %15 = vsyncadd [#allocation3], %s14
      %s16 = sshll.u32 [#allocation2], 4
      %s17 = int_to_ptr.vmem [resolvable:$true] %s16
      %22 = dma.hbm_to_vmem [thread:$0]  %s1, 3072, %s17, [#allocation3], 64, 64, 4
    $region9: #{td3_policy_forward.1} parent=1 // pred_fallthru
      _
    // Predicated region
    $region10: #{td3_policy_forward.1} parent=1 // pred_check
      _
    $region11: #{td3_policy_forward.1} parent=1 // pred_check_branch
      %24 = sbr.rel (0) target = $region13
    $region12: #{td3_policy_forward.1} parent=1 // pred_region
      _
    $region13: #{td3_policy_forward.1} parent=1 // pred_fallthru
      _
    // Predicated region
    $region14: #{td3_policy_forward.1} parent=1 // pred_check
      _
    $region15: #{td3_policy_forward.1} parent=1 // pred_check_branch
      %26 = sbr.rel (0) target = $region17
    $region16: #{td3_policy_forward.1} parent=1 // pred_region
      %27 = dma.done [#allocation3], 3072
    $region17: #{td3_policy_forward.1} parent=1 // pred_fallthru
      _
    %v29 = vld [vmem:[%s0] sm:$0xf]
    %v30 = vld [vmem:[%s0 + $0x4] sm:$0xf]
    %v31 = vld [vmem:[#allocation2] sm:$0xf]
    %v32 = vld [vmem:[#allocation2 + $0x4] sm:$0xf]
    %v33 = vld [vmem:[#allocation2 + $0x8] sm:$0xf]
    %v34 = vld [vmem:[#allocation2 + $0xc] sm:$0xf]
    %v35 = vld [vmem:[#allocation2 + $0x10] sm:$0xf]
    %v36 = vld [vmem:[#allocation2 + $0x14] sm:$0xf]
    %v37 = vld [vmem:[#allocation2 + $0x18] sm:$0xf]
    %v38 = vld [vmem:[#allocation2 + $0x1c] sm:$0xf]
    %v39 = vld [vmem:[#allocation2 + $0x20] sm:$0xf]
    %v40 = vld [vmem:[#allocation2 + $0x24] sm:$0xf]
    %v41 = vld [vmem:[#allocation2 + $0x28] sm:$0xf]
    %v42 = vld [vmem:[#allocation2 + $0x2c] sm:$0xf]
    %v43 = vld [vmem:[#allocation2 + $0x30] sm:$0xf]
    %v44 = vld [vmem:[#allocation2 + $0x34] sm:$0xf]
    %v45 = vld [vmem:[#allocation2 + $0x38] sm:$0xf]
    %v46 = vld [vmem:[#allocation2 + $0x3c] sm:$0xf]
    %v47 = vld [vmem:[%s2] sm:$0x1]
    %v48 = vlaneseq
    %v49 = vshrl.u32 %v48, 7
    %v50 = vsub.s32 0, %v49
    %v51 = vrot.slane %v47, %v50
    %v54 = vunpack.c.l.b16 %v29
    %v55 = vunpack.c.l.b16 %v30
    %v56 = vpack.c.b16 %v55, %v54
    %v74 = vunpack.c.l.b16 %v31
    %v75 = vunpack.c.l.b16 %v32
    %v76 = vunpack.c.l.b16 %v33
    %v77 = vunpack.c.l.b16 %v34
    %v78 = vunpack.c.l.b16 %v35
    %v79 = vunpack.c.l.b16 %v36
    %v80 = vunpack.c.l.b16 %v37
    %v81 = vunpack.c.l.b16 %v38
    %v82 = vunpack.c.l.b16 %v39
    %v83 = vunpack.c.l.b16 %v40
    %v84 = vunpack.c.l.b16 %v41
    %v85 = vunpack.c.l.b16 %v42
    %v86 = vunpack.c.l.b16 %v43
    %v87 = vunpack.c.l.b16 %v44
    %v88 = vunpack.c.l.b16 %v45
    %v89 = vunpack.c.l.b16 %v46
    %v90 = vpack.c.b16 %v75, %v74
    %v91 = vpack.c.b16 %v77, %v76
    %v92 = vpack.c.b16 %v79, %v78
    %v93 = vpack.c.b16 %v81, %v80
    %v94 = vpack.c.b16 %v83, %v82
    %v95 = vpack.c.b16 %v85, %v84
    %v96 = vpack.c.b16 %v87, %v86
    %v97 = vpack.c.b16 %v89, %v88
    %106 = vmatprep.subr.bf16.mxu0 0
    %107 = vmatpush1.bf16.msra.mxu0 %v97
    %108 = vmatprep.subr.bf16.mxu0 0
    %109 = vmatpush1.bf16.msra.mxu0 %v96
    %110 = vmatprep.subr.bf16.mxu0 0
    %111 = vmatpush1.bf16.msra.mxu0 %v95
    %112 = vmatprep.subr.bf16.mxu0 0
    %113 = vmatpush1.bf16.msra.mxu0 %v94
    %114 = vmatprep.subr.bf16.mxu0 0
    %115 = vmatpush1.bf16.msra.mxu0 %v93
    %116 = vmatprep.subr.bf16.mxu0 0
    %117 = vmatpush1.bf16.msra.mxu0 %v92
    %118 = vmatprep.subr.bf16.mxu0 0
    %119 = vmatpush1.bf16.msra.mxu0 %v91
    %120 = vmatprep.subr.bf16.mxu0 0
    %121 = vmatpush1.bf16.msra.mxu0 %v90
    %122 = vmatprep.subr.bf16.mxu0 0
    %123 = vmatpush2.bf16.msra.mxu0 0
    %124 = vmatprep.subr.bf16.mxu0 0
    %125 = vmatpush2.bf16.msra.mxu0 0
    %126 = vmatprep.subr.bf16.mxu0 0
    %127 = vmatpush2.bf16.msra.mxu0 0
    %128 = vmatprep.subr.bf16.mxu0 0
    %129 = vmatpush2.bf16.msra.mxu0 0
    %130 = vmatprep.subr.bf16.mxu0 0
    %131 = vmatpush2.bf16.msra.mxu0 0
    %132 = vmatprep.subr.bf16.mxu0 0
    %133 = vmatpush2.bf16.msra.mxu0 0
    %134 = vmatprep.subr.bf16.mxu0 0
    %135 = vmatpush2.bf16.msra.mxu0 0
    %136 = vmatprep.subr.bf16.mxu0 0
    %137 = vmatpush2.bf16.msra.mxu0 0
    %138 = vmatprep.mubr.bf16.mxu0 0
    %139 = vmatmul.mubr.bf16.gmra.mxu0 %v56
    %v140 = vpop.f32.mrf.mxu0
    %v141 = vadd.f32 %v51, %v140
    %v142 = vpop.f32.mrf.mxu0
    %v143 = vpop.f32.mrf.mxu0
    %v144 = vadd.f32 %v51, %v143
    %v145 = vpop.f32.mrf.mxu0
    %146 = vdwg.mxu0
    %v147 = vtanh.pop %v141
    %v148 = vtanh.pop %v144
    %v149 = vpack.c.bf16 %v148, %v147
    %s150 = scalar_lea.vmem [#allocation2], 64
    %v151 = vld [vmem:[%s150] sm:$0xf]
    %v152 = vld [vmem:[%s150 + $0x4] sm:$0xf]
    %v153 = vld [vmem:[%s150 + $0x8] sm:$0xf]
    %v154 = vld [vmem:[%s150 + $0xc] sm:$0xf]
    %v155 = vld [vmem:[%s150 + $0x10] sm:$0xf]
    %v156 = vld [vmem:[%s150 + $0x14] sm:$0xf]
    %v157 = vld [vmem:[%s150 + $0x18] sm:$0xf]
    %v158 = vld [vmem:[%s150 + $0x1c] sm:$0xf]
    %v159 = vld [vmem:[%s150 + $0x20] sm:$0xf]
    %v160 = vld [vmem:[%s150 + $0x24] sm:$0xf]
    %v161 = vld [vmem:[%s150 + $0x28] sm:$0xf]
    %v162 = vld [vmem:[%s150 + $0x2c] sm:$0xf]
    %v163 = vld [vmem:[%s150 + $0x30] sm:$0xf]
    %v164 = vld [vmem:[%s150 + $0x34] sm:$0xf]
    %v165 = vld [vmem:[%s150 + $0x38] sm:$0xf]
    %v166 = vld [vmem:[%s150 + $0x3c] sm:$0xf]
    %v167 = vld [vmem:[%s2 + $0x1] sm:$0x1]
    %v168 = vlaneseq
    %v169 = vshrl.u32 %v168, 7
    %v170 = vsub.s32 0, %v169
    %v171 = vrot.slane %v167, %v170
    %v188 = vunpack.c.l.b16 %v151
    %v189 = vunpack.c.l.b16 %v152
    %v190 = vunpack.c.l.b16 %v153
    %v191 = vunpack.c.l.b16 %v154
    %v192 = vunpack.c.l.b16 %v155
    %v193 = vunpack.c.l.b16 %v156
    %v194 = vunpack.c.l.b16 %v157
    %v195 = vunpack.c.l.b16 %v158
    %v196 = vunpack.c.l.b16 %v159
    %v197 = vunpack.c.l.b16 %v160
    %v198 = vunpack.c.l.b16 %v161
    %v199 = vunpack.c.l.b16 %v162
    %v200 = vunpack.c.l.b16 %v163
    %v201 = vunpack.c.l.b16 %v164
    %v202 = vunpack.c.l.b16 %v165
    %v203 = vunpack.c.l.b16 %v166
    %v204 = vpack.c.b16 %v189, %v188
    %v205 = vpack.c.b16 %v191, %v190
    %v206 = vpack.c.b16 %v193, %v192
    %v207 = vpack.c.b16 %v195, %v194
    %v208 = vpack.c.b16 %v197, %v196
    %v209 = vpack.c.b16 %v199, %v198
    %v210 = vpack.c.b16 %v201, %v200
    %v211 = vpack.c.b16 %v203, %v202
    %220 = vmatprep.subr.bf16.mxu0 0
    %221 = vmatpush1.bf16.msra.mxu0 %v211
    %222 = vmatprep.subr.bf16.mxu0 0
    %223 = vmatpush1.bf16.msra.mxu0 %v210
    %224 = vmatprep.subr.bf16.mxu0 0
    %225 = vmatpush1.bf16.msra.mxu0 %v209
    %226 = vmatprep.subr.bf16.mxu0 0
    %227 = vmatpush1.bf16.msra.mxu0 %v208
    %228 = vmatprep.subr.bf16.mxu0 0
    %229 = vmatpush1.bf16.msra.mxu0 %v207
    %230 = vmatprep.subr.bf16.mxu0 0
    %231 = vmatpush1.bf16.msra.mxu0 %v206
    %232 = vmatprep.subr.bf16.mxu0 0
    %233 = vmatpush1.bf16.msra.mxu0 %v205
    %234 = vmatprep.subr.bf16.mxu0 0
    %235 = vmatpush1.bf16.msra.mxu0 %v204
    %236 = vmatprep.subr.bf16.mxu0 0
    %237 = vmatpush2.bf16.msra.mxu0 0
    %238 = vmatprep.subr.bf16.mxu0 0
    %239 = vmatpush2.bf16.msra.mxu0 0
    %240 = vmatprep.subr.bf16.mxu0 0
    %241 = vmatpush2.bf16.msra.mxu0 0
    %242 = vmatprep.subr.bf16.mxu0 0
    %243 = vmatpush2.bf16.msra.mxu0 0
    %244 = vmatprep.subr.bf16.mxu0 0
    %245 = vmatpush2.bf16.msra.mxu0 0
    %246 = vmatprep.subr.bf16.mxu0 0
    %247 = vmatpush2.bf16.msra.mxu0 0
    %248 = vmatprep.subr.bf16.mxu0 0
    %249 = vmatpush2.bf16.msra.mxu0 0
    %250 = vmatprep.subr.bf16.mxu0 0
    %251 = vmatpush2.bf16.msra.mxu0 0
    %252 = vmatprep.mubr.bf16.mxu0 0
    %253 = vmatmul.mubr.bf16.gmra.mxu0 %v149
    %v254 = vpop.f32.mrf.mxu0
    %v255 = vadd.f32 %v171, %v254
    %v256 = vpop.f32.mrf.mxu0
    %v257 = vpop.f32.mrf.mxu0
    %v258 = vadd.f32 %v171, %v257
    %v259 = vpop.f32.mrf.mxu0
    %260 = vdwg.mxu0
    %v261 = vtanh.pop %v255
    %v262 = vtanh.pop %v258
    %v263 = vpack.c.bf16 %v262, %v261
    %s264 = scalar_lea.vmem [#allocation2], 128
    %v265 = vld [vmem:[%s264] sm:$0xf]
    %v266 = vld [vmem:[%s264 + $0x4] sm:$0xf]
    %v267 = vld [vmem:[%s264 + $0x8] sm:$0xf]
    %v268 = vld [vmem:[%s264 + $0xc] sm:$0xf]
    %v269 = vld [vmem:[%s264 + $0x10] sm:$0xf]
    %v270 = vld [vmem:[%s264 + $0x14] sm:$0xf]
    %v271 = vld [vmem:[%s264 + $0x18] sm:$0xf]
    %v272 = vld [vmem:[%s264 + $0x1c] sm:$0xf]
    %v273 = vld [vmem:[%s264 + $0x20] sm:$0xf]
    %v274 = vld [vmem:[%s264 + $0x24] sm:$0xf]
    %v275 = vld [vmem:[%s264 + $0x28] sm:$0xf]
    %v276 = vld [vmem:[%s264 + $0x2c] sm:$0xf]
    %v277 = vld [vmem:[%s264 + $0x30] sm:$0xf]
    %v278 = vld [vmem:[%s264 + $0x34] sm:$0xf]
    %v279 = vld [vmem:[%s264 + $0x38] sm:$0xf]
    %v280 = vld [vmem:[%s264 + $0x3c] sm:$0xf]
    %v281 = vld [vmem:[%s2 + $0x2] sm:$0x1]
    %v282 = vlaneseq
    %v283 = vshrl.u32 %v282, 7
    %v284 = vsub.s32 0, %v283
    %v285 = vrot.slane %v281, %v284
    %v302 = vunpack.c.l.b16 %v265
    %v303 = vunpack.c.l.b16 %v266
    %v304 = vunpack.c.l.b16 %v267
    %v305 = vunpack.c.l.b16 %v268
    %v306 = vunpack.c.l.b16 %v269
    %v307 = vunpack.c.l.b16 %v270
    %v308 = vunpack.c.l.b16 %v271
    %v309 = vunpack.c.l.b16 %v272
    %v310 = vunpack.c.l.b16 %v273
    %v311 = vunpack.c.l.b16 %v274
    %v312 = vunpack.c.l.b16 %v275
    %v313 = vunpack.c.l.b16 %v276
    %v314 = vunpack.c.l.b16 %v277
    %v315 = vunpack.c.l.b16 %v278
    %v316 = vunpack.c.l.b16 %v279
    %v317 = vunpack.c.l.b16 %v280
    %v318 = vpack.c.b16 %v303, %v302
    %v319 = vpack.c.b16 %v305, %v304
    %v320 = vpack.c.b16 %v307, %v306
    %v321 = vpack.c.b16 %v309, %v308
    %v322 = vpack.c.b16 %v311, %v310
    %v323 = vpack.c.b16 %v313, %v312
    %v324 = vpack.c.b16 %v315, %v314
    %v325 = vpack.c.b16 %v317, %v316
    %334 = vmatprep.subr.bf16.mxu0 0
    %335 = vmatpush1.bf16.msra.mxu0 %v325
    %336 = vmatprep.subr.bf16.mxu0 0
    %337 = vmatpush1.bf16.msra.mxu0 %v324
    %338 = vmatprep.subr.bf16.mxu0 0
    %339 = vmatpush1.bf16.msra.mxu0 %v323
    %340 = vmatprep.subr.bf16.mxu0 0
    %341 = vmatpush1.bf16.msra.mxu0 %v322
    %342 = vmatprep.subr.bf16.mxu0 0
    %343 = vmatpush1.bf16.msra.mxu0 %v321
    %344 = vmatprep.subr.bf16.mxu0 0
    %345 = vmatpush1.bf16.msra.mxu0 %v320
    %346 = vmatprep.subr.bf16.mxu0 0
    %347 = vmatpush1.bf16.msra.mxu0 %v319
    %348 = vmatprep.subr.bf16.mxu0 0
    %349 = vmatpush1.bf16.msra.mxu0 %v318
    %350 = vmatprep.subr.bf16.mxu0 0
    %351 = vmatpush2.bf16.msra.mxu0 0
    %352 = vmatprep.subr.bf16.mxu0 0
    %353 = vmatpush2.bf16.msra.mxu0 0
    %354 = vmatprep.subr.bf16.mxu0 0
    %355 = vmatpush2.bf16.msra.mxu0 0
    %356 = vmatprep.subr.bf16.mxu0 0
    %357 = vmatpush2.bf16.msra.mxu0 0
    %358 = vmatprep.subr.bf16.mxu0 0
    %359 = vmatpush2.bf16.msra.mxu0 0
    %360 = vmatprep.subr.bf16.mxu0 0
    %361 = vmatpush2.bf16.msra.mxu0 0
    %362 = vmatprep.subr.bf16.mxu0 0
    %363 = vmatpush2.bf16.msra.mxu0 0
    %364 = vmatprep.subr.bf16.mxu0 0
    %365 = vmatpush2.bf16.msra.mxu0 0
    %366 = vmatprep.mubr.bf16.mxu0 0
    %367 = vmatmul.mubr.bf16.gmra.mxu0 %v263
    %v368 = vpop.f32.mrf.mxu0
    %v369 = vadd.f32 %v285, %v368
    %v370 = vpop.f32.mrf.mxu0
    %v371 = vpop.f32.mrf.mxu0
    %v372 = vadd.f32 %v285, %v371
    %v373 = vpop.f32.mrf.mxu0
    %374 = vdwg.mxu0
    %v375 = vtanh.pop %v369
    %v376 = vtanh.pop %v372
    %v377 = vmul.f32 %v375, 2.0
    %v378 = vmul.f32 %v376, 2.0
    %379 = vst [vmem:[%s3] sm:$0xff] %v377
    %380 = vst [vmem:[%s3 + $0x8] sm:$0xff] %v378
    // Predicated region
    $region18: #{td3_policy_forward.1} parent=1 // pred_check
      _
    $region19: #{td3_policy_forward.1} parent=1 // pred_check_branch
      %382 = sbr.rel (0) target = $region21
    $region20: #{td3_policy_forward.1} parent=1 // pred_region
      _
    $region21: #{td3_policy_forward.1} parent=1 // pred_fallthru
      _
    // Predicated region
    $region22: #{td3_policy_forward.1} parent=1 // pred_check
      _
    $region23: #{td3_policy_forward.1} parent=1 // pred_check_branch
      %384 = sbr.rel (0) target = $region25
    $region24: #{td3_policy_forward.1} parent=1 // pred_region
      _
    $region25: #{td3_policy_forward.1} parent=1 // pred_fallthru
      _
    %385 = vsyncpa [#allocation3], 1

</llo_original>
